<compile_context>
chip_gen: v5e
topology: v5e:2x2
jax: 0.10.0
libtpu: 0.0.40
codegen_flags: <defaults>
</compile_context>

<pallas_src>
import numpy as np

import jax
import jax.numpy as jnp
from jax.experimental import pallas as pl
from jax.experimental.pallas import tpu as pltpu

_EPS = 1e-5


def _rn1d_kernel(x_ref, wc_ref, wf1_ref, par_ref, msk_ref, se1_ref, se2_ref,
                 out_ref):
    f32 = jnp.float32
    B = out_ref.shape[0]
    C = wc_ref.shape[1]
    H = wf1_ref.shape[1]

    def mm(a, b):
        return jnp.dot(a, b, preferred_element_type=f32)

    def conv_bn_relu_pool(x, wf, m_lo, m_hi, bias, gamma, beta, se):
        rows, cout = x.shape[0], wf.shape[1]
        # Conv1d(k=3, pad=1): all 3 taps in ONE matmul.  The +/-1 length
        # shifts are row rolls (no MXU work); rows whose neighbour would come
        # from another sample (or the zero padding) are zeroed by the
        # (rows, 1) boundary masks.
        x_prev = jnp.roll(x, 1, axis=0) * m_lo       # x[l-1], zero at l == 0
        x_next = jnp.roll(x, -1, axis=0) * m_hi      # x[l+1], zero at l == L-1
        y = mm(jnp.concatenate([x_prev, x, x_next], axis=1), wf) + bias
        # BatchNorm1d (training mode): biased stats over (batch, length),
        # single reduction pass over [y | y*y]; var = E[y^2] - mean^2.
        s = jnp.sum(jnp.concatenate([y, y * y], axis=1), axis=0,
                    keepdims=True) * (1.0 / rows)
        mean = s[:, :cout]
        var = s[:, cout:] - mean * mean
        y = (y - mean) * jax.lax.rsqrt(var + _EPS) * gamma + beta
        y = jnp.maximum(y, 0.0)                      # ReLU
        # MaxPool1d(2): pair-max via a row roll + ONE even-row selector.
        m = jnp.maximum(y, jnp.roll(y, -1, axis=0))
        return mm(se, m)

    # ---- layer 1: (B*24, 2C) -> (B*12, C), rows b*12 + i ----
    y = conv_bn_relu_pool(
        x_ref[...], wc_ref[0:6 * C, :],
        msk_ref[:, 0:1], msk_ref[:, 1:2],
        par_ref[0:1, 0:C], par_ref[1:2, 0:C], par_ref[2:3, 0:C],
        se1_ref[...])
    # ---- layer 2: (B*12, C) -> (6*B, C), rows reordered to l*B + b ----
    y = conv_bn_relu_pool(
        y, wc_ref[6 * C:9 * C, :],
        msk_ref[0:12 * B, 2:3], msk_ref[0:12 * B, 3:4],
        par_ref[3:4, 0:C], par_ref[4:5, 0:C], par_ref[5:6, 0:C],
        se2_ref[...])
    # ---- fc1 (ReLU): lay the 6 taps along lanes -> ONE (B,6C)x(6C,H) dot.
    #      (wf1 rows were permuted in the wrapper to match torch's c*6+l.)
    flat = jnp.concatenate([y[l * B:(l + 1) * B, :] for l in range(6)], axis=1)
    h = jnp.maximum(mm(flat, wf1_ref[...]) + par_ref[6:7, 0:H], 0.0)
    # ---- fc2 + sigmoid: lane-reduce h against the fc2 weight row, one store.
    logit = jnp.sum(h * par_ref[8:9, 0:H], axis=1, keepdims=True)
    out_ref[...] = jax.nn.sigmoid(logit + par_ref[7:8, 0:1])
    # TODO(synk): for large B emit a lane-dense (1, B) output instead of the
    #             masked (B, 1) store; at B=2 the difference is noise.


# --------------------------- small constant tables ---------------------------
def _boundary_masks(B, L):
    """(B*L, 4) 0/1 masks.  Cols 0/1 zero the l==0 / l==L-1 rows for the
    layer-1 conv shifts; cols 2/3 (first B*L/2 rows) do the same for layer 2."""
    Lh = L // 2
    m = np.zeros((B * L, 4), np.float32)
    for b in range(B):
        for l in range(L):
            r = b * L + l
            m[r, 0] = 0.0 if l == 0 else 1.0
            m[r, 1] = 0.0 if l == L - 1 else 1.0
    for b in range(B):
        for i in range(Lh):
            r = b * Lh + i
            m[r, 2] = 0.0 if i == 0 else 1.0
            m[r, 3] = 0.0 if i == Lh - 1 else 1.0
    return m


def _pool_selector(B, L, reorder):
    """(B*L/2, B*L) even-row selector for MaxPool1d(2) on a (B*L, C) slab.

    Output row order: b*(L//2)+i if not reorder, else i*B+b (tap-major, so the
    fc1 taps are contiguous row blocks)."""
    Lh = L // 2
    se = np.zeros((B * Lh, B * L), np.float32)
    for b in range(B):
        for i in range(Lh):
            q = (i * B + b) if reorder else (b * Lh + i)
            se[q, b * L + 2 * i] = 1.0
    return se


# ------------------------------------ wrapper ------------------------------------
def relation_network_1d(x_ncl, p):
    """x_ncl: (B, 2*C, L=24) float32, PyTorch NCL layout."""
    B, C2, L = x_ncl.shape
    C = C2 // 2
    H = p["fc1_b"].shape[0]
    assert L == 24, "fc1 expects C*6 features after two MaxPool1d(2) => L = 24"

    # Channels-last, batch-stacked slab: rows ordered b*L + l.
    x_st = jnp.transpose(x_ncl, (0, 2, 1)).reshape(B * L, C2)

    # Both conv weights with the 3 taps stacked along the contraction axis,
    # packed into one (9C, C) slab: rows [0, 6C) = conv1, [6C, 9C) = conv2.
    w1f = jnp.transpose(p["conv1_w"], (2, 1, 0)).reshape(3 * C2, C)
    w2f = jnp.transpose(p["conv2_w"], (2, 1, 0)).reshape(3 * C, C)
    wc = jnp.concatenate([w1f, w2f], axis=0)

    # fc1 weight rows permuted to the kernel's l*C + c flatten order.
    wf1 = jnp.transpose(p["fc1_w"].reshape(H, C, 6), (2, 1, 0)).reshape(6 * C, H)

    # All small per-channel / per-feature vectors packed into one (9, P) slab.
    P = max(C, H)
    row = lambda v: jnp.pad(jnp.asarray(v, jnp.float32).reshape(-1),
                            (0, P - v.size))
    par = jnp.stack([row(p["conv1_b"]), row(p["bn1_g"]), row(p["bn1_b"]),
                     row(p["conv2_b"]), row(p["bn2_g"]), row(p["bn2_b"]),
                     row(p["fc1_b"]), row(p["fc2_b"]), row(p["fc2_w"])])

    msk = jnp.asarray(_boundary_masks(B, L))
    se1 = jnp.asarray(_pool_selector(B, L, reorder=False))       # -> b*12 + i
    se2 = jnp.asarray(_pool_selector(B, L // 2, reorder=True))   # -> l*B + b

    args = (x_st, wc, wf1, par, msk, se1, se2)
    # TODO(synk): for non-toy batch sizes, add a batch-tile grid axis with
    # "parallel" semantics (and a two-pass partial-stats BatchNorm) so v7x's
    # two TensorCores each take half the batch; the whole-batch-resident form
    # is only a few KiB of VMEM now that the shift matrices are gone.
    return pl.pallas_call(
        _rn1d_kernel,
        out_shape=jax.ShapeDtypeStruct((B, 1), jnp.float32),
        in_specs=[pl.BlockSpec(memory_space=pltpu.MemorySpace.VMEM)] * len(args),
        out_specs=pl.BlockSpec(memory_space=pltpu.MemorySpace.VMEM),
    )(*args)


# -------------------- pure-JAX reference (for verification) --------------------
def _ref_forward(x, p):
    def conv1d(x, w, b):
        y = jax.lax.conv_general_dilated(
            x, w, window_strides=(1,), padding=((1, 1),),
            dimension_numbers=("NCH", "OIH", "NCH"))
        return y + b[None, :, None]

    def bn(x, g, be):
        mean = x.mean(axis=(0, 2), keepdims=True)
        var = ((x - mean) ** 2).mean(axis=(0, 2), keepdims=True)
        return (x - mean) / jnp.sqrt(var + _EPS) * g[None, :, None] + be[None, :, None]

    def pool(x):
        B, C, L = x.shape
        return x.reshape(B, C, L // 2, 2).max(axis=-1)

    y = pool(jax.nn.relu(bn(conv1d(x, p["conv1_w"], p["conv1_b"]),
                            p["bn1_g"], p["bn1_b"])))
    y = pool(jax.nn.relu(bn(conv1d(y, p["conv2_w"], p["conv2_b"]),
                            p["bn2_g"], p["bn2_b"])))
    flat = y.reshape(y.shape[0], -1)
    h = jax.nn.relu(flat @ p["fc1_w"].T + p["fc1_b"])
    return jax.nn.sigmoid(h @ p["fc2_w"].T + p["fc2_b"])


def _init_params(key, input_size, hidden_size):
    C, H = input_size, hidden_size
    ks = jax.random.split(key, 10)
    rnd = lambda k, s, sc=0.1: jax.random.normal(k, s, jnp.float32) * sc
    return dict(
        conv1_w=rnd(ks[0], (C, 2 * C, 3)),
        conv1_b=rnd(ks[1], (C,)),
        bn1_g=1.0 + rnd(ks[2], (C,)),
        bn1_b=rnd(ks[3], (C,)),
        conv2_w=rnd(ks[4], (C, C, 3)),
        conv2_b=rnd(ks[5], (C,)),
        bn2_g=1.0 + rnd(ks[6], (C,)),
        bn2_b=rnd(ks[7], (C,)),
        fc1_w=rnd(ks[8], (H, C * 6)),
        fc1_b=jnp.zeros((H,), jnp.float32) + 0.01,
        fc2_w=rnd(ks[9], (1, H)),
        fc2_b=jnp.zeros((1,), jnp.float32) + 0.02,
    )


if __name__ == "__main__":
    B, C, H = 2, 8, 32
    L = 24  # fc1 expects C*6 features after two MaxPool1d(2) => L = 24

    key = jax.random.PRNGKey(0)
    kx, kp = jax.random.split(key)
    x = jax.random.normal(kx, (B, 2 * C, L), jnp.float32)   # PyTorch NCL input
    params = _init_params(kp, C, H)

    out = jax.block_until_ready(relation_network_1d(x, params))
    ref = jax.block_until_ready(_ref_forward(x, params))

    assert out.shape == (B, 1), out.shape
    assert jnp.allclose(out, ref, atol=1e-3, rtol=1e-3), (out, ref)
    print("KERNEL_OK")
</pallas_src>

<mosaic_0001>
module attributes {stable_mosaic.version = 11 : i64} {
  func.func @_rn1d_kernel(%arg0: memref<48x16xf32, #tpu.memory_space<vmem>>, %arg1: memref<72x8xf32, #tpu.memory_space<vmem>>, %arg2: memref<48x32xf32, #tpu.memory_space<vmem>>, %arg3: memref<9x32xf32, #tpu.memory_space<vmem>>, %arg4: memref<48x4xf32, #tpu.memory_space<vmem>>, %arg5: memref<24x48xf32, #tpu.memory_space<vmem>>, %arg6: memref<12x24xf32, #tpu.memory_space<vmem>>, %arg7: memref<2x1xf32, #tpu.memory_space<vmem>>) attributes {dimension_semantics = [], scalar_prefetch = 0 : i64, scratch_operands = 0 : i64, tpu.core_type = #tpu.core_type<tc>} {
    %c0 = arith.constant 0 : index
    %c0_0 = arith.constant 0 : index
    %0 = vector.load %arg0[%c0, %c0_0] : memref<48x16xf32, #tpu.memory_space<vmem>>, vector<48x16xf32>
    %c0_1 = arith.constant 0 : index
    %c0_2 = arith.constant 0 : index
    %1 = vector.load %arg1[%c0_1, %c0_2] : memref<72x8xf32, #tpu.memory_space<vmem>>, vector<48x8xf32>
    %c0_3 = arith.constant 0 : index
    %c0_4 = arith.constant 0 : index
    %2 = vector.load %arg4[%c0_3, %c0_4] : memref<48x4xf32, #tpu.memory_space<vmem>>, vector<48x1xf32>
    %c0_5 = arith.constant 0 : index
    %c1 = arith.constant 1 : index
    %3 = vector.load %arg4[%c0_5, %c1] : memref<48x4xf32, #tpu.memory_space<vmem>>, vector<48x1xf32>
    %c0_6 = arith.constant 0 : index
    %c0_7 = arith.constant 0 : index
    %4 = vector.load %arg3[%c0_6, %c0_7] : memref<9x32xf32, #tpu.memory_space<vmem>>, vector<1x8xf32>
    %c1_8 = arith.constant 1 : index
    %c0_9 = arith.constant 0 : index
    %5 = vector.load %arg3[%c1_8, %c0_9] : memref<9x32xf32, #tpu.memory_space<vmem>>, vector<1x8xf32>
    %c2 = arith.constant 2 : index
    %c0_10 = arith.constant 0 : index
    %6 = vector.load %arg3[%c2, %c0_10] : memref<9x32xf32, #tpu.memory_space<vmem>>, vector<1x8xf32>
    %c0_11 = arith.constant 0 : index
    %c0_12 = arith.constant 0 : index
    %7 = vector.load %arg5[%c0_11, %c0_12] : memref<24x48xf32, #tpu.memory_space<vmem>>, vector<24x48xf32>
    %8 = vector.extract_strided_slice %0 {offsets = [47, 0], sizes = [1, 16], strides = [1, 1]} : vector<48x16xf32> to vector<1x16xf32>
    %9 = vector.extract_strided_slice %0 {offsets = [0, 0], sizes = [47, 16], strides = [1, 1]} : vector<48x16xf32> to vector<47x16xf32>
    %10 = tpu.concatenate %8, %9 in 0 : vector<1x16xf32>, vector<47x16xf32> -> vector<48x16xf32>
    %11 = vector.broadcast %2 : vector<48x1xf32> to vector<48x16xf32>
    %12 = arith.mulf %10, %11 : vector<48x16xf32>
    %13 = vector.extract_strided_slice %0 {offsets = [1, 0], sizes = [47, 16], strides = [1, 1]} : vector<48x16xf32> to vector<47x16xf32>
    %14 = vector.extract_strided_slice %0 {offsets = [0, 0], sizes = [1, 16], strides = [1, 1]} : vector<48x16xf32> to vector<1x16xf32>
    %15 = tpu.concatenate %13, %14 in 0 : vector<47x16xf32>, vector<1x16xf32> -> vector<48x16xf32>
    %16 = vector.broadcast %3 : vector<48x1xf32> to vector<48x16xf32>
    %17 = arith.mulf %15, %16 : vector<48x16xf32>
    %18 = tpu.concatenate %12, %0, %17 in 1 : vector<48x16xf32>, vector<48x16xf32>, vector<48x16xf32> -> vector<48x48xf32>
    %cst = arith.constant dense<0.000000e+00> : vector<48x8xf32>
    %19 = tpu.matmul %18, %1, %cst {dimension_numbers = #tpu.dot_dimension_numbers<[1], [0], [0], [1], [0, 0, 1, 1], [], []>} : vector<48x48xf32>, vector<48x8xf32>, vector<48x8xf32> -> vector<48x8xf32>
    %20 = vector.broadcast %4 : vector<1x8xf32> to vector<48x8xf32>
    %21 = arith.addf %19, %20 : vector<48x8xf32>
    %22 = arith.mulf %21, %21 : vector<48x8xf32>
    %23 = tpu.concatenate %21, %22 in 1 : vector<48x8xf32>, vector<48x8xf32> -> vector<48x16xf32>
    %cst_13 = arith.constant dense<0.000000e+00> : vector<16xf32>
    %24 = vector.multi_reduction <add>, %23, %cst_13 [0] : vector<48x16xf32> to vector<16xf32>
    %25 = vector.shape_cast %24 : vector<16xf32> to vector<1x16xf32>
    %cst_14 = arith.constant 0.020833334 : f32
    %26 = vector.broadcast %cst_14 : f32 to vector<1x16xf32>
    %27 = arith.mulf %25, %26 : vector<1x16xf32>
    %28 = vector.extract_strided_slice %27 {offsets = [0, 0], sizes = [1, 8], strides = [1, 1]} : vector<1x16xf32> to vector<1x8xf32>
    %29 = vector.extract_strided_slice %27 {offsets = [0, 8], sizes = [1, 8], strides = [1, 1]} : vector<1x16xf32> to vector<1x8xf32>
    %30 = arith.mulf %28, %28 : vector<1x8xf32>
    %31 = arith.subf %29, %30 : vector<1x8xf32>
    %32 = vector.broadcast %28 : vector<1x8xf32> to vector<48x8xf32>
    %33 = arith.subf %21, %32 : vector<48x8xf32>
    %cst_15 = arith.constant 9.99999974E-6 : f32
    %34 = vector.broadcast %cst_15 : f32 to vector<1x8xf32>
    %35 = arith.addf %31, %34 : vector<1x8xf32>
    %36 = math.rsqrt %35 : vector<1x8xf32>
    %37 = vector.broadcast %36 : vector<1x8xf32> to vector<48x8xf32>
    %38 = arith.mulf %33, %37 : vector<48x8xf32>
    %39 = vector.broadcast %5 : vector<1x8xf32> to vector<48x8xf32>
    %40 = arith.mulf %38, %39 : vector<48x8xf32>
    %41 = vector.broadcast %6 : vector<1x8xf32> to vector<48x8xf32>
    %42 = arith.addf %40, %41 : vector<48x8xf32>
    %cst_16 = arith.constant 0.000000e+00 : f32
    %43 = vector.broadcast %cst_16 : f32 to vector<48x8xf32>
    %44 = arith.maximumf %42, %43 : vector<48x8xf32>
    %45 = vector.extract_strided_slice %44 {offsets = [1, 0], sizes = [47, 8], strides = [1, 1]} : vector<48x8xf32> to vector<47x8xf32>
    %46 = vector.extract_strided_slice %44 {offsets = [0, 0], sizes = [1, 8], strides = [1, 1]} : vector<48x8xf32> to vector<1x8xf32>
    %47 = tpu.concatenate %45, %46 in 0 : vector<47x8xf32>, vector<1x8xf32> -> vector<48x8xf32>
    %48 = arith.maximumf %44, %47 : vector<48x8xf32>
    %cst_17 = arith.constant dense<0.000000e+00> : vector<24x8xf32>
    %49 = tpu.matmul %7, %48, %cst_17 {dimension_numbers = #tpu.dot_dimension_numbers<[1], [0], [0], [1], [0, 0, 1, 1], [], []>} : vector<24x48xf32>, vector<48x8xf32>, vector<24x8xf32> -> vector<24x8xf32>
    %c48 = arith.constant 48 : index
    %c0_18 = arith.constant 0 : index
    %50 = vector.load %arg1[%c48, %c0_18] : memref<72x8xf32, #tpu.memory_space<vmem>>, vector<24x8xf32>
    %c0_19 = arith.constant 0 : index
    %c2_20 = arith.constant 2 : index
    %51 = vector.load %arg4[%c0_19, %c2_20] : memref<48x4xf32, #tpu.memory_space<vmem>>, vector<24x1xf32>
    %c0_21 = arith.constant 0 : index
    %c3 = arith.constant 3 : index
    %52 = vector.load %arg4[%c0_21, %c3] : memref<48x4xf32, #tpu.memory_space<vmem>>, vector<24x1xf32>
    %c3_22 = arith.constant 3 : index
    %c0_23 = arith.constant 0 : index
    %53 = vector.load %arg3[%c3_22, %c0_23] : memref<9x32xf32, #tpu.memory_space<vmem>>, vector<1x8xf32>
    %c4 = arith.constant 4 : index
    %c0_24 = arith.constant 0 : index
    %54 = vector.load %arg3[%c4, %c0_24] : memref<9x32xf32, #tpu.memory_space<vmem>>, vector<1x8xf32>
    %c5 = arith.constant 5 : index
    %c0_25 = arith.constant 0 : index
    %55 = vector.load %arg3[%c5, %c0_25] : memref<9x32xf32, #tpu.memory_space<vmem>>, vector<1x8xf32>
    %c0_26 = arith.constant 0 : index
    %c0_27 = arith.constant 0 : index
    %56 = vector.load %arg6[%c0_26, %c0_27] : memref<12x24xf32, #tpu.memory_space<vmem>>, vector<12x24xf32>
    %57 = vector.extract_strided_slice %49 {offsets = [23, 0], sizes = [1, 8], strides = [1, 1]} : vector<24x8xf32> to vector<1x8xf32>
    %58 = vector.extract_strided_slice %49 {offsets = [0, 0], sizes = [23, 8], strides = [1, 1]} : vector<24x8xf32> to vector<23x8xf32>
    %59 = tpu.concatenate %57, %58 in 0 : vector<1x8xf32>, vector<23x8xf32> -> vector<24x8xf32>
    %60 = vector.broadcast %51 : vector<24x1xf32> to vector<24x8xf32>
    %61 = arith.mulf %59, %60 : vector<24x8xf32>
    %62 = vector.extract_strided_slice %49 {offsets = [1, 0], sizes = [23, 8], strides = [1, 1]} : vector<24x8xf32> to vector<23x8xf32>
    %63 = vector.extract_strided_slice %49 {offsets = [0, 0], sizes = [1, 8], strides = [1, 1]} : vector<24x8xf32> to vector<1x8xf32>
    %64 = tpu.concatenate %62, %63 in 0 : vector<23x8xf32>, vector<1x8xf32> -> vector<24x8xf32>
    %65 = vector.broadcast %52 : vector<24x1xf32> to vector<24x8xf32>
    %66 = arith.mulf %64, %65 : vector<24x8xf32>
    %67 = tpu.concatenate %61, %49, %66 in 1 : vector<24x8xf32>, vector<24x8xf32>, vector<24x8xf32> -> vector<24x24xf32>
    %cst_28 = arith.constant dense<0.000000e+00> : vector<24x8xf32>
    %68 = tpu.matmul %67, %50, %cst_28 {dimension_numbers = #tpu.dot_dimension_numbers<[1], [0], [0], [1], [0, 0, 1, 1], [], []>} : vector<24x24xf32>, vector<24x8xf32>, vector<24x8xf32> -> vector<24x8xf32>
    %69 = vector.broadcast %53 : vector<1x8xf32> to vector<24x8xf32>
    %70 = arith.addf %68, %69 : vector<24x8xf32>
    %71 = arith.mulf %70, %70 : vector<24x8xf32>
    %72 = tpu.concatenate %70, %71 in 1 : vector<24x8xf32>, vector<24x8xf32> -> vector<24x16xf32>
    %cst_29 = arith.constant dense<0.000000e+00> : vector<16xf32>
    %73 = vector.multi_reduction <add>, %72, %cst_29 [0] : vector<24x16xf32> to vector<16xf32>
    %74 = vector.shape_cast %73 : vector<16xf32> to vector<1x16xf32>
    %cst_30 = arith.constant 0.0416666679 : f32
    %75 = vector.broadcast %cst_30 : f32 to vector<1x16xf32>
    %76 = arith.mulf %74, %75 : vector<1x16xf32>
    %77 = vector.extract_strided_slice %76 {offsets = [0, 0], sizes = [1, 8], strides = [1, 1]} : vector<1x16xf32> to vector<1x8xf32>
    %78 = vector.extract_strided_slice %76 {offsets = [0, 8], sizes = [1, 8], strides = [1, 1]} : vector<1x16xf32> to vector<1x8xf32>
    %79 = arith.mulf %77, %77 : vector<1x8xf32>
    %80 = arith.subf %78, %79 : vector<1x8xf32>
    %81 = vector.broadcast %77 : vector<1x8xf32> to vector<24x8xf32>
    %82 = arith.subf %70, %81 : vector<24x8xf32>
    %cst_31 = arith.constant 9.99999974E-6 : f32
    %83 = vector.broadcast %cst_31 : f32 to vector<1x8xf32>
    %84 = arith.addf %80, %83 : vector<1x8xf32>
    %85 = math.rsqrt %84 : vector<1x8xf32>
    %86 = vector.broadcast %85 : vector<1x8xf32> to vector<24x8xf32>
    %87 = arith.mulf %82, %86 : vector<24x8xf32>
    %88 = vector.broadcast %54 : vector<1x8xf32> to vector<24x8xf32>
    %89 = arith.mulf %87, %88 : vector<24x8xf32>
    %90 = vector.broadcast %55 : vector<1x8xf32> to vector<24x8xf32>
    %91 = arith.addf %89, %90 : vector<24x8xf32>
    %cst_32 = arith.constant 0.000000e+00 : f32
    %92 = vector.broadcast %cst_32 : f32 to vector<24x8xf32>
    %93 = arith.maximumf %91, %92 : vector<24x8xf32>
    %94 = vector.extract_strided_slice %93 {offsets = [1, 0], sizes = [23, 8], strides = [1, 1]} : vector<24x8xf32> to vector<23x8xf32>
    %95 = vector.extract_strided_slice %93 {offsets = [0, 0], sizes = [1, 8], strides = [1, 1]} : vector<24x8xf32> to vector<1x8xf32>
    %96 = tpu.concatenate %94, %95 in 0 : vector<23x8xf32>, vector<1x8xf32> -> vector<24x8xf32>
    %97 = arith.maximumf %93, %96 : vector<24x8xf32>
    %cst_33 = arith.constant dense<0.000000e+00> : vector<12x8xf32>
    %98 = tpu.matmul %56, %97, %cst_33 {dimension_numbers = #tpu.dot_dimension_numbers<[1], [0], [0], [1], [0, 0, 1, 1], [], []>} : vector<12x24xf32>, vector<24x8xf32>, vector<12x8xf32> -> vector<12x8xf32>
    %99 = vector.extract_strided_slice %98 {offsets = [0, 0], sizes = [2, 8], strides = [1, 1]} : vector<12x8xf32> to vector<2x8xf32>
    %100 = vector.extract_strided_slice %98 {offsets = [2, 0], sizes = [2, 8], strides = [1, 1]} : vector<12x8xf32> to vector<2x8xf32>
    %101 = vector.extract_strided_slice %98 {offsets = [4, 0], sizes = [2, 8], strides = [1, 1]} : vector<12x8xf32> to vector<2x8xf32>
    %102 = vector.extract_strided_slice %98 {offsets = [6, 0], sizes = [2, 8], strides = [1, 1]} : vector<12x8xf32> to vector<2x8xf32>
    %103 = vector.extract_strided_slice %98 {offsets = [8, 0], sizes = [2, 8], strides = [1, 1]} : vector<12x8xf32> to vector<2x8xf32>
    %104 = vector.extract_strided_slice %98 {offsets = [10, 0], sizes = [2, 8], strides = [1, 1]} : vector<12x8xf32> to vector<2x8xf32>
    %105 = tpu.concatenate %99, %100, %101, %102, %103, %104 in 1 : vector<2x8xf32>, vector<2x8xf32>, vector<2x8xf32>, vector<2x8xf32>, vector<2x8xf32>, vector<2x8xf32> -> vector<2x48xf32>
    %c0_34 = arith.constant 0 : index
    %c0_35 = arith.constant 0 : index
    %106 = vector.load %arg2[%c0_34, %c0_35] : memref<48x32xf32, #tpu.memory_space<vmem>>, vector<48x32xf32>
    %cst_36 = arith.constant dense<0.000000e+00> : vector<2x32xf32>
    %107 = tpu.matmul %105, %106, %cst_36 {dimension_numbers = #tpu.dot_dimension_numbers<[1], [0], [0], [1], [0, 0, 1, 1], [], []>} : vector<2x48xf32>, vector<48x32xf32>, vector<2x32xf32> -> vector<2x32xf32>
    %c6 = arith.constant 6 : index
    %c0_37 = arith.constant 0 : index
    %108 = vector.load %arg3[%c6, %c0_37] : memref<9x32xf32, #tpu.memory_space<vmem>>, vector<1x32xf32>
    %109 = vector.broadcast %108 : vector<1x32xf32> to vector<2x32xf32>
    %110 = arith.addf %107, %109 : vector<2x32xf32>
    %cst_38 = arith.constant 0.000000e+00 : f32
    %111 = vector.broadcast %cst_38 : f32 to vector<2x32xf32>
    %112 = arith.maximumf %110, %111 : vector<2x32xf32>
    %c8 = arith.constant 8 : index
    %c0_39 = arith.constant 0 : index
    %113 = vector.load %arg3[%c8, %c0_39] : memref<9x32xf32, #tpu.memory_space<vmem>>, vector<1x32xf32>
    %114 = vector.broadcast %113 : vector<1x32xf32> to vector<2x32xf32>
    %115 = arith.mulf %112, %114 : vector<2x32xf32>
    %cst_40 = arith.constant dense<0.000000e+00> : vector<2xf32>
    %116 = vector.multi_reduction <add>, %115, %cst_40 [1] : vector<2x32xf32> to vector<2xf32>
    %117 = vector.shape_cast %116 : vector<2xf32> to vector<2x1xf32>
    %c7 = arith.constant 7 : index
    %c0_41 = arith.constant 0 : index
    %118 = vector.load %arg3[%c7, %c0_41] : memref<9x32xf32, #tpu.memory_space<vmem>>, vector<1x1xf32>
    %119 = vector.broadcast %118 : vector<1x1xf32> to vector<2x1xf32>
    %120 = arith.addf %117, %119 : vector<2x1xf32>
    %121 = arith.negf %120 : vector<2x1xf32>
    %122 = math.exp %121 : vector<2x1xf32>
    %cst_42 = arith.constant 1.000000e+00 : f32
    %123 = vector.broadcast %cst_42 : f32 to vector<2x1xf32>
    %124 = arith.addf %123, %122 : vector<2x1xf32>
    %125 = arith.divf %123, %124 : vector<2x1xf32>
    %c0_43 = arith.constant 0 : index
    %c0_44 = arith.constant 0 : index
    %126 = vector.load %arg7[%c0_43, %c0_44] : memref<2x1xf32, #tpu.memory_space<vmem>>, vector<2x1xf32>
    tpu.vector_store %arg7[%c0_43, %c0_44], %125 {strides = array<i32>} : memref<2x1xf32, #tpu.memory_space<vmem>>, vector<2x1xf32>,
    return
  }
}

</mosaic_0001>

<llo_original>
// kernel: tpu_custom_call.1
$region0: #{tpu_custom_call.1}
  #allocation0 [shape = 'u32[]', space=smem, size = 0x4, offset = 0x4, fixed_abs, tag = 'smem constant byte address 0x4 - core index']
  #allocation1 [shape = 'u32[72,128]{1,0:T(1,128)}', space=vmem, size = 0x9000, scoped, tag = 'internal scratch']
  %s0 = inlined_call_operand.vmem [shape: f32[48,16], index: 0, kind: input, shape index: {}]
  %s1 = inlined_call_operand.vmem [shape: f32[72,8], index: 1, kind: input, shape index: {}]
  %s2 = inlined_call_operand.vmem [shape: f32[48,32], index: 2, kind: input, shape index: {}]
  %s3 = inlined_call_operand.vmem [shape: f32[9,32], index: 3, kind: input, shape index: {}]
  %s4 = inlined_call_operand.vmem [shape: f32[48,4], index: 4, kind: input, shape index: {}]
  %s5 = inlined_call_operand.vmem [shape: f32[24,48], index: 5, kind: input, shape index: {}]
  %s6 = inlined_call_operand.vmem [shape: f32[12,24], index: 6, kind: input, shape index: {}]
  %s7 = inlined_call_operand.vmem [shape: f32[2,1], index: 7, kind: output, shape index: {}]
  %s8 = sld [smem:[#allocation0]]
  $region38: #{tpu_custom_call.1} parent=0
    _
  %s10 = ssub.s32 1, %s8
  %s11 = scalar_select 0, %s10, %s8
  // Predicated region
  $region2: #{tpu_custom_call.1} parent=0 // pred_check
    _
  $region3: #{tpu_custom_call.1} parent=0 // pred_check_branch
    %13 = sbr.rel (0) target = $region5
  $region4: #{tpu_custom_call.1} parent=0 // pred_region
    _
  $region5: #{tpu_custom_call.1} parent=0 // pred_fallthru
    _
  // Predicated region
  $region6: #{tpu_custom_call.1} parent=0 // pred_check
    _
  $region7: #{tpu_custom_call.1} parent=0 // pred_check_branch
    %15 = sbr.rel (0) target = $region9
  $region8: #{tpu_custom_call.1} parent=0 // pred_region
    _
  $region9: #{tpu_custom_call.1} parent=0 // pred_fallthru
    _
  // Predicated region
  $region10: #{tpu_custom_call.1} parent=0 // pred_check
    _
  $region11: #{tpu_custom_call.1} parent=0 // pred_check_branch
    %17 = sbr.rel (0) target = $region13
  $region12: #{tpu_custom_call.1} parent=0 // pred_region
    _
  $region13: #{tpu_custom_call.1} parent=0 // pred_fallthru
    _
  // Predicated region
  $region14: #{tpu_custom_call.1} parent=0 // pred_check
    _
  $region15: #{tpu_custom_call.1} parent=0 // pred_check_branch
    %19 = sbr.rel (0) target = $region17
  $region16: #{tpu_custom_call.1} parent=0 // pred_region
    _
  $region17: #{tpu_custom_call.1} parent=0 // pred_fallthru
    _
  // Predicated region
  $region18: #{tpu_custom_call.1} parent=0 // pred_check
    _
  $region19: #{tpu_custom_call.1} parent=0 // pred_check_branch
    %21 = sbr.rel (0) target = $region21
  $region20: #{tpu_custom_call.1} parent=0 // pred_region
    _
  $region21: #{tpu_custom_call.1} parent=0 // pred_fallthru
    _
  // Predicated region
  $region22: #{tpu_custom_call.1} parent=0 // pred_check
    _
  $region23: #{tpu_custom_call.1} parent=0 // pred_check_branch
    %23 = sbr.rel (0) target = $region25
  $region24: #{tpu_custom_call.1} parent=0 // pred_region
    _
  $region25: #{tpu_custom_call.1} parent=0 // pred_fallthru
    _
  // Predicated region
  $region26: #{tpu_custom_call.1} parent=0 // pred_check
    _
  $region27: #{tpu_custom_call.1} parent=0 // pred_check_branch
    %25 = sbr.rel (0) target = $region29
  $region28: #{tpu_custom_call.1} parent=0 // pred_region
    _
  $region29: #{tpu_custom_call.1} parent=0 // pred_fallthru
    _
  %v26 = vld [vmem:[%s0] sm:$0xff]
  %v27 = vld [vmem:[%s0 + $0x8] sm:$0xff]
  %v28 = vld [vmem:[%s0 + $0x10] sm:$0xff]
  %v29 = vld [vmem:[%s0 + $0x18] sm:$0xff]
  %v30 = vld [vmem:[%s0 + $0x20] sm:$0xff]
  %v31 = vld [vmem:[%s0 + $0x28] sm:$0xff]
  %v32 = vld [vmem:[%s1] sm:$0xff]
  %v33 = vld [vmem:[%s1 + $0x8] sm:$0xff]
  %v34 = vld [vmem:[%s1 + $0x10] sm:$0xff]
  %v35 = vld [vmem:[%s1 + $0x18] sm:$0xff]
  %v36 = vld [vmem:[%s1 + $0x20] sm:$0xff]
  %v37 = vld [vmem:[%s1 + $0x28] sm:$0xff]
  %v38 = vld [vmem:[%s4] sm:$0xff]
  %v39 = vld [vmem:[%s4 + $0x8] sm:$0xff]
  %v40 = vld [vmem:[%s4 + $0x10] sm:$0xff]
  %v41 = vld [vmem:[%s4 + $0x18] sm:$0xff]
  %v42 = vld [vmem:[%s4 + $0x20] sm:$0xff]
  %v43 = vld [vmem:[%s4 + $0x28] sm:$0xff]
  %v44 = vld [vmem:[%s3] sm:$0x1]
  %v45 = vld [vmem:[%s3 + $0x1] sm:$0x1]
  %v46 = vld [vmem:[%s3 + $0x2] sm:$0x1]
  %v47 = vld [vmem:[%s5] sm:$0xff]
  %v48 = vld [vmem:[%s5 + $0x8] sm:$0xff]
  %v49 = vld [vmem:[%s5 + $0x10] sm:$0xff]
  %v51 = vrot.slane %v31, 7
  %vm58 = vcmask 1040384
  %v59 = vrot.slane %v26, 7
  %v60 = vrot.slane %v27, 7
  %v61 = vsel %vm58, %v59, %v60
  %v62 = vrot.slane %v28, 7
  %v63 = vsel %vm58, %v60, %v62
  %v64 = vrot.slane %v29, 7
  %v65 = vsel %vm58, %v62, %v64
  %v66 = vrot.slane %v30, 7
  %v67 = vsel %vm58, %v64, %v66
  %v68 = vsel %vm58, %v66, %v51
  %v75 = vsel %vm58, %v51, %v59
  %77 = vset.pattern.permute.xlu0 0
  %78 = vperm.xlu0 %77, %v38
  %v79 = vpop.permute.xlu0 %78
  %82 = vset.pattern.permute.xlu0 0
  %83 = vperm.xlu0 %82, %v39
  %v84 = vpop.permute.xlu0 %83
  %87 = vset.pattern.permute.xlu0 0
  %88 = vperm.xlu0 %87, %v40
  %v89 = vpop.permute.xlu0 %88
  %92 = vset.pattern.permute.xlu0 0
  %93 = vperm.xlu0 %92, %v41
  %v94 = vpop.permute.xlu0 %93
  %97 = vset.pattern.permute.xlu0 0
  %98 = vperm.xlu0 %97, %v42
  %v99 = vpop.permute.xlu0 %98
  %102 = vset.pattern.permute.xlu0 0
  %103 = vperm.xlu0 %102, %v43
  %v104 = vpop.permute.xlu0 %103
  %v106 = vmul.f32 %v75, %v79
  %v107 = vmul.f32 %v61, %v84
  %v108 = vmul.f32 %v63, %v89
  %v109 = vmul.f32 %v65, %v94
  %v110 = vmul.f32 %v67, %v99
  %v111 = vmul.f32 %v68, %v104
  %vm112 = vcmask 1046528
  %v113 = vrot.slane %v26, 1
  %v114 = vrot.slane %v27, 1
  %v115 = vsel %vm112, %v113, %v114
  %v116 = vrot.slane %v28, 1
  %v117 = vsel %vm112, %v114, %v116
  %v118 = vrot.slane %v29, 1
  %v119 = vsel %vm112, %v116, %v118
  %v120 = vrot.slane %v30, 1
  %v121 = vsel %vm112, %v118, %v120
  %v122 = vrot.slane %v31, 1
  %v123 = vsel %vm112, %v120, %v122
  %v131 = vsel %vm112, %v122, %v113
  %132 = vset.pattern.permute.xlu0 1
  %133 = vperm.xlu0 %132, %v38
  %v134 = vpop.permute.xlu0 %133
  %136 = vset.pattern.permute.xlu0 1
  %137 = vperm.xlu0 %136, %v39
  %v138 = vpop.permute.xlu0 %137
  %140 = vset.pattern.permute.xlu0 1
  %141 = vperm.xlu0 %140, %v40
  %v142 = vpop.permute.xlu0 %141
  %144 = vset.pattern.permute.xlu0 1
  %145 = vperm.xlu0 %144, %v41
  %v146 = vpop.permute.xlu0 %145
  %148 = vset.pattern.permute.xlu0 1
  %149 = vperm.xlu0 %148, %v42
  %v150 = vpop.permute.xlu0 %149
  %152 = vset.pattern.permute.xlu0 1
  %153 = vperm.xlu0 %152, %v43
  %v154 = vpop.permute.xlu0 %153
  %v156 = vmul.f32 %v115, %v134
  %v157 = vmul.f32 %v117, %v138
  %v158 = vmul.f32 %v119, %v142
  %v159 = vmul.f32 %v121, %v146
  %v160 = vmul.f32 %v123, %v150
  %v161 = vmul.f32 %v131, %v154
  %162 = vrot.lane.b32.xlu0 %v26, 16
  %v163 = vpop.permute.xlu0 %162
  %164 = vrot.lane.b32.xlu0 %v27, 16
  %v165 = vpop.permute.xlu0 %164
  %166 = vrot.lane.b32.xlu0 %v28, 16
  %v167 = vpop.permute.xlu0 %166
  %168 = vrot.lane.b32.xlu0 %v29, 16
  %v169 = vpop.permute.xlu0 %168
  %170 = vrot.lane.b32.xlu0 %v30, 16
  %v171 = vpop.permute.xlu0 %170
  %172 = vrot.lane.b32.xlu0 %v31, 16
  %v173 = vpop.permute.xlu0 %172
  %186 = vrot.lane.b32.xlu0 %v156, 32
  %v187 = vpop.permute.xlu0 %186
  %188 = vrot.lane.b32.xlu0 %v157, 32
  %v189 = vpop.permute.xlu0 %188
  %190 = vrot.lane.b32.xlu0 %v158, 32
  %v191 = vpop.permute.xlu0 %190
  %192 = vrot.lane.b32.xlu0 %v159, 32
  %v193 = vpop.permute.xlu0 %192
  %194 = vrot.lane.b32.xlu0 %v160, 32
  %v195 = vpop.permute.xlu0 %194
  %196 = vrot.lane.b32.xlu0 %v161, 32
  %v197 = vpop.permute.xlu0 %196
  %vm204 = vcmask 130048
  %v205 = vsel %vm204, %v106, %v163
  %v206 = vsel %vm204, %v107, %v165
  %v207 = vsel %vm204, %v108, %v167
  %v208 = vsel %vm204, %v109, %v169
  %v209 = vsel %vm204, %v110, %v171
  %v210 = vsel %vm204, %v111, %v173
  %vm211 = vcmask 261120
  %v212 = vsel %vm211, %v205, %v187
  %v213 = vsel %vm211, %v206, %v189
  %v214 = vsel %vm211, %v207, %v191
  %v215 = vsel %vm211, %v208, %v193
  %v216 = vsel %vm211, %v209, %v195
  %v217 = vsel %vm211, %v210, %v197
  %v218 = vperm.slane %v44, 0
  %vm219 = vcmask 392192
  %v221 = vsel %vm219, %v212, 0
  %v224 = vsel %vm219, %v213, 0
  %v227 = vsel %vm219, %v214, 0
  %v230 = vsel %vm219, %v215, 0
  %v233 = vsel %vm219, %v216, 0
  %v236 = vsel %vm219, %v217, 0
  %238 = vmatpush.msra.mxu0 0.0
  %239 = vmatpush.msra.mxu0 0.0
  %240 = vmatpush.msra.mxu0 0.0
  %241 = vmatpush.msra.mxu0 0.0
  %242 = vmatpush.msra.mxu0 0.0
  %243 = vmatpush.msra.mxu0 0.0
  %244 = vmatpush.msra.mxu0 0.0
  %245 = vmatpush.msra.mxu0 0.0
  %246 = vmatpush.msra.mxu0 0.0
  %247 = vmatpush.msra.mxu0 0.0
  %248 = vmatpush.msra.mxu0 %v37
  %249 = vmatpush.msra.mxu0 %v36
  %250 = vmatpush.msra.mxu0 %v35
  %251 = vmatpush.msra.mxu0 %v34
  %252 = vmatpush.msra.mxu0 %v33
  %253 = vmatpush.msra.mxu0 %v32
  %254 = vmatmul.f32.gmra.mxu0 %v221
  %v255 = vpop.f32.mrf.mxu0
  %v256 = vadd.f32 %v218, %v255
  %257 = vmatmul.f32.gmra.mxu0 %v224
  %v258 = vpop.f32.mrf.mxu0
  %v259 = vadd.f32 %v218, %v258
  %260 = vmatmul.f32.gmra.mxu0 %v227
  %v261 = vpop.f32.mrf.mxu0
  %v262 = vadd.f32 %v218, %v261
  %263 = vmatmul.f32.gmra.mxu0 %v230
  %v264 = vpop.f32.mrf.mxu0
  %v265 = vadd.f32 %v218, %v264
  %266 = vmatmul.f32.gmra.mxu0 %v233
  %v267 = vpop.f32.mrf.mxu0
  %v268 = vadd.f32 %v218, %v267
  %269 = vmatmul.f32.gmra.mxu0 %v236
  %v270 = vpop.f32.mrf.mxu0
  %v271 = vadd.f32 %v218, %v270
  %272 = vdwg.mxu0
  %v273 = vmul.f32 %v256, %v256
  %v274 = vmul.f32 %v259, %v259
  %v275 = vmul.f32 %v262, %v262
  %v276 = vmul.f32 %v265, %v265
  %v277 = vmul.f32 %v268, %v268
  %v278 = vmul.f32 %v271, %v271
  %285 = vrot.lane.b32.xlu0 %v273, 8
  %v286 = vpop.permute.xlu0 %285
  %287 = vrot.lane.b32.xlu0 %v274, 8
  %v288 = vpop.permute.xlu0 %287
  %289 = vrot.lane.b32.xlu0 %v275, 8
  %v290 = vpop.permute.xlu0 %289
  %291 = vrot.lane.b32.xlu0 %v276, 8
  %v292 = vpop.permute.xlu0 %291
  %293 = vrot.lane.b32.xlu0 %v277, 8
  %v294 = vpop.permute.xlu0 %293
  %295 = vrot.lane.b32.xlu0 %v278, 8
  %v296 = vpop.permute.xlu0 %295
  %vm303 = vcmask 64512
  %v304 = vsel %vm303, %v256, %v286
  %v305 = vsel %vm303, %v259, %v288
  %v306 = vsel %vm303, %v262, %v290
  %v307 = vsel %vm303, %v265, %v292
  %v308 = vsel %vm303, %v268, %v294
  %v309 = vsel %vm303, %v271, %v296
  %v310 = vsel %vm204, %v304, 0.0
  %v311 = vsel %vm204, %v305, 0.0
  %v312 = vadd.f32 %v310, %v311
  %v313 = vsel %vm204, %v306, 0.0
  %v314 = vadd.f32 %v312, %v313
  %v315 = vsel %vm204, %v307, 0.0
  %v316 = vadd.f32 %v314, %v315
  %v317 = vsel %vm204, %v308, 0.0
  %v318 = vadd.f32 %v316, %v317
  %v319 = vsel %vm204, %v309, 0.0
  %v320 = vadd.f32 %v318, %v319
  %v321 = vrot.slane %v320, 4
  %v322 = vadd.f32 %v320, %v321
  %v323 = vrot.slane %v322, 2
  %v324 = vadd.f32 %v322, %v323
  %v325 = vrot.slane %v324, 1
  %v326 = vadd.f32 %v324, %v325
  %v327 = vmul.f32 %v326, 0.020833334
  %v328 = vmul.f32 %v327, %v327
  %330 = vrot.lane.b32.xlu0 %v328, 8
  %v331 = vpop.permute.xlu0 %330
  %v333 = vsub.f32 %v327, %v331
  %v334 = vsub.f32 %v256, %v327
  %v335 = vsub.f32 %v259, %v327
  %v336 = vsub.f32 %v262, %v327
  %v337 = vsub.f32 %v265, %v327
  %v338 = vsub.f32 %v268, %v327
  %v339 = vsub.f32 %v271, %v327
  %v340 = vadd.f32 %v333, 1e-05
  %v341 = vrsqrt.pop %v340
  %v342 = vmul.f32 %v341, %v340
  %v343 = vmul.f32 %v342, %v341
  %v344 = vmul.f32 0.5, %v343
  %v345 = vsub.f32 1.5, %v344
  %v346 = vmul.f32 %v341, %v345
  %vm347 = vweird.f32 %v340
  %vm348 = vweird.f32 %v341
  %vm349 = vmor %vm347, %vm348
  %v350 = vsel %vm349, %v341, %v346
  %v351 = vperm.slane %v350, 0
  %353 = vrot.lane.b32.xlu0 %v351, 120
  %v354 = vpop.permute.xlu0 %353
  %v356 = vmul.f32 %v334, %v354
  %v357 = vmul.f32 %v335, %v354
  %v358 = vmul.f32 %v336, %v354
  %v359 = vmul.f32 %v337, %v354
  %v360 = vmul.f32 %v338, %v354
  %v361 = vmul.f32 %v339, %v354
  %v362 = vperm.slane %v45, 0
  %v363 = vmul.f32 %v356, %v362
  %v364 = vmul.f32 %v357, %v362
  %v365 = vmul.f32 %v358, %v362
  %v366 = vmul.f32 %v359, %v362
  %v367 = vmul.f32 %v360, %v362
  %v368 = vmul.f32 %v361, %v362
  %v369 = vperm.slane %v46, 0
  %v370 = vadd.f32 %v363, %v369
  %v371 = vadd.f32 %v364, %v369
  %v372 = vadd.f32 %v365, %v369
  %v373 = vadd.f32 %v366, %v369
  %v374 = vadd.f32 %v367, %v369
  %v375 = vadd.f32 %v368, %v369
  %v376 = vmax.f32 %v370, 0.0
  %v377 = vmax.f32 %v371, 0.0
  %v378 = vmax.f32 %v372, 0.0
  %v379 = vmax.f32 %v373, 0.0
  %v380 = vmax.f32 %v374, 0.0
  %v381 = vmax.f32 %v375, 0.0
  %v388 = vrot.slane %v376, 1
  %v389 = vrot.slane %v377, 1
  %v390 = vsel %vm112, %v388, %v389
  %v391 = vrot.slane %v378, 1
  %v392 = vsel %vm112, %v389, %v391
  %v393 = vrot.slane %v379, 1
  %v394 = vsel %vm112, %v391, %v393
  %v395 = vrot.slane %v380, 1
  %v396 = vsel %vm112, %v393, %v395
  %v397 = vrot.slane %v381, 1
  %v398 = vsel %vm112, %v395, %v397
  %v406 = vsel %vm112, %v397, %v388
  %v407 = vmax.f32 %v376, %v390
  %v408 = vmax.f32 %v377, %v392
  %v409 = vmax.f32 %v378, %v394
  %v410 = vmax.f32 %v379, %v396
  %v411 = vmax.f32 %v380, %v398
  %v412 = vmax.f32 %v381, %v406
  %v414 = vsel %vm219, %v47, 0
  %v417 = vsel %vm219, %v48, 0
  %v420 = vsel %vm219, %v49, 0
  %422 = vmatpush.msra.mxu0 0.0
  %423 = vmatpush.msra.mxu0 0.0
  %424 = vmatpush.msra.mxu0 0.0
  %425 = vmatpush.msra.mxu0 0.0
  %426 = vmatpush.msra.mxu0 0.0
  %427 = vmatpush.msra.mxu0 0.0
  %428 = vmatpush.msra.mxu0 0.0
  %429 = vmatpush.msra.mxu0 0.0
  %430 = vmatpush.msra.mxu0 0.0
  %431 = vmatpush.msra.mxu0 0.0
  %432 = vmatpush.msra.mxu0 %v412
  %433 = vmatpush.msra.mxu0 %v411
  %434 = vmatpush.msra.mxu0 %v410
  %435 = vmatpush.msra.mxu0 %v409
  %436 = vmatpush.msra.mxu0 %v408
  %437 = vmatpush.msra.mxu0 %v407
  %438 = vmatmul.f32.gmra.mxu0 %v414
  %v439 = vpop.f32.mrf.mxu0
  %v440 = vadd.f32 0.0, %v439
  %441 = vmatmul.f32.gmra.mxu0 %v417
  %v442 = vpop.f32.mrf.mxu0
  %v443 = vadd.f32 0.0, %v442
  %444 = vmatmul.f32.gmra.mxu0 %v420
  %v445 = vpop.f32.mrf.mxu0
  %v446 = vadd.f32 0.0, %v445
  %447 = vdwg.mxu0
  %v448 = vld [vmem:[%s1 + $0x30] sm:$0xff]
  %v449 = vld [vmem:[%s1 + $0x38] sm:$0xff]
  %v450 = vld [vmem:[%s1 + $0x40] sm:$0xff]
  %v451 = vld [vmem:[%s4] sm:$0xff]
  %v452 = vld [vmem:[%s4 + $0x8] sm:$0xff]
  %v453 = vld [vmem:[%s4 + $0x10] sm:$0xff]
  %v454 = vld [vmem:[%s3 + $0x3] sm:$0x1]
  %v455 = vld [vmem:[%s3 + $0x4] sm:$0x1]
  %v456 = vld [vmem:[%s3 + $0x5] sm:$0x1]
  %v457 = vld [vmem:[%s6] sm:$0xff]
  %v458 = vld [vmem:[%s6 + $0x8] sm:$0xf]
  %v460 = vrot.slane %v446, 7
  %v464 = vrot.slane %v440, 7
  %v465 = vrot.slane %v443, 7
  %v466 = vsel %vm58, %v464, %v465
  %v467 = vsel %vm58, %v465, %v460
  %v471 = vsel %vm58, %v460, %v464
  %473 = vset.pattern.permute.xlu0 2
  %474 = vperm.xlu0 %473, %v451
  %v475 = vpop.permute.xlu0 %474
  %478 = vset.pattern.permute.xlu0 2
  %479 = vperm.xlu0 %478, %v452
  %v480 = vpop.permute.xlu0 %479
  %483 = vset.pattern.permute.xlu0 2
  %484 = vperm.xlu0 %483, %v453
  %v485 = vpop.permute.xlu0 %484
  %v487 = vmul.f32 %v471, %v475
  %v488 = vmul.f32 %v466, %v480
  %v489 = vmul.f32 %v467, %v485
  %v490 = vrot.slane %v440, 1
  %v491 = vrot.slane %v443, 1
  %v492 = vsel %vm112, %v490, %v491
  %v493 = vrot.slane %v446, 1
  %v494 = vsel %vm112, %v491, %v493
  %v499 = vsel %vm112, %v493, %v490
  %500 = vset.pattern.permute.xlu0 3
  %501 = vperm.xlu0 %500, %v451
  %v502 = vpop.permute.xlu0 %501
  %504 = vset.pattern.permute.xlu0 3
  %505 = vperm.xlu0 %504, %v452
  %v506 = vpop.permute.xlu0 %505
  %508 = vset.pattern.permute.xlu0 3
  %509 = vperm.xlu0 %508, %v453
  %v510 = vpop.permute.xlu0 %509
  %v512 = vmul.f32 %v492, %v502
  %v513 = vmul.f32 %v494, %v506
  %v514 = vmul.f32 %v499, %v510
  %515 = vrot.lane.b32.xlu0 %v440, 8
  %v516 = vpop.permute.xlu0 %515
  %517 = vrot.lane.b32.xlu0 %v443, 8
  %v518 = vpop.permute.xlu0 %517
  %519 = vrot.lane.b32.xlu0 %v446, 8
  %v520 = vpop.permute.xlu0 %519
  %527 = vrot.lane.b32.xlu0 %v512, 16
  %v528 = vpop.permute.xlu0 %527
  %529 = vrot.lane.b32.xlu0 %v513, 16
  %v530 = vpop.permute.xlu0 %529
  %531 = vrot.lane.b32.xlu0 %v514, 16
  %v532 = vpop.permute.xlu0 %531
  %v536 = vsel %vm303, %v487, %v516
  %v537 = vsel %vm303, %v488, %v518
  %v538 = vsel %vm303, %v489, %v520
  %v539 = vsel %vm204, %v536, %v528
  %v540 = vsel %vm204, %v537, %v530
  %v541 = vsel %vm204, %v538, %v532
  %v542 = vperm.slane %v454, 0
  %vm543 = vcmask 195584
  %v545 = vsel %vm543, %v539, 0
  %v548 = vsel %vm543, %v540, 0
  %v551 = vsel %vm543, %v541, 0
  %553 = vmatpush.msra.mxu0 0.0
  %554 = vmatpush.msra.mxu0 0.0
  %555 = vmatpush.msra.mxu0 0.0
  %556 = vmatpush.msra.mxu0 0.0
  %557 = vmatpush.msra.mxu0 0.0
  %558 = vmatpush.msra.mxu0 0.0
  %559 = vmatpush.msra.mxu0 0.0
  %560 = vmatpush.msra.mxu0 0.0
  %561 = vmatpush.msra.mxu0 0.0
  %562 = vmatpush.msra.mxu0 0.0
  %563 = vmatpush.msra.mxu0 0.0
  %564 = vmatpush.msra.mxu0 0.0
  %565 = vmatpush.msra.mxu0 0.0
  %566 = vmatpush.msra.mxu0 %v450
  %567 = vmatpush.msra.mxu0 %v449
  %568 = vmatpush.msra.mxu0 %v448
  %569 = vmatmul.f32.gmra.mxu0 %v545
  %v570 = vpop.f32.mrf.mxu0
  %v571 = vadd.f32 %v542, %v570
  %572 = vmatmul.f32.gmra.mxu0 %v548
  %v573 = vpop.f32.mrf.mxu0
  %v574 = vadd.f32 %v542, %v573
  %575 = vmatmul.f32.gmra.mxu0 %v551
  %v576 = vpop.f32.mrf.mxu0
  %v577 = vadd.f32 %v542, %v576
  %578 = vdwg.mxu0
  %v579 = vmul.f32 %v571, %v571
  %v580 = vmul.f32 %v574, %v574
  %v581 = vmul.f32 %v577, %v577
  %585 = vrot.lane.b32.xlu0 %v579, 8
  %v586 = vpop.permute.xlu0 %585
  %587 = vrot.lane.b32.xlu0 %v580, 8
  %v588 = vpop.permute.xlu0 %587
  %589 = vrot.lane.b32.xlu0 %v581, 8
  %v590 = vpop.permute.xlu0 %589
  %v594 = vsel %vm303, %v571, %v586
  %v595 = vsel %vm303, %v574, %v588
  %v596 = vsel %vm303, %v577, %v590
  %v597 = vsel %vm204, %v594, 0.0
  %v598 = vsel %vm204, %v595, 0.0
  %v599 = vadd.f32 %v597, %v598
  %v600 = vsel %vm204, %v596, 0.0
  %v601 = vadd.f32 %v599, %v600
  %v602 = vrot.slane %v601, 4
  %v603 = vadd.f32 %v601, %v602
  %v604 = vrot.slane %v603, 2
  %v605 = vadd.f32 %v603, %v604
  %v606 = vrot.slane %v605, 1
  %v607 = vadd.f32 %v605, %v606
  %v608 = vmul.f32 %v607, 0.041666668
  %v609 = vmul.f32 %v608, %v608
  %611 = vrot.lane.b32.xlu0 %v609, 8
  %v612 = vpop.permute.xlu0 %611
  %v614 = vsub.f32 %v608, %v612
  %v615 = vsub.f32 %v571, %v608
  %v616 = vsub.f32 %v574, %v608
  %v617 = vsub.f32 %v577, %v608
  %v618 = vadd.f32 %v614, 1e-05
  %v619 = vrsqrt.pop %v618
  %v620 = vmul.f32 %v619, %v618
  %v621 = vmul.f32 %v620, %v619
  %v622 = vmul.f32 0.5, %v621
  %v623 = vsub.f32 1.5, %v622
  %v624 = vmul.f32 %v619, %v623
  %vm625 = vweird.f32 %v618
  %vm626 = vweird.f32 %v619
  %vm627 = vmor %vm625, %vm626
  %v628 = vsel %vm627, %v619, %v624
  %v629 = vperm.slane %v628, 0
  %631 = vrot.lane.b32.xlu0 %v629, 120
  %v632 = vpop.permute.xlu0 %631
  %v634 = vmul.f32 %v615, %v632
  %v635 = vmul.f32 %v616, %v632
  %v636 = vmul.f32 %v617, %v632
  %v637 = vperm.slane %v455, 0
  %v638 = vmul.f32 %v634, %v637
  %v639 = vmul.f32 %v635, %v637
  %v640 = vmul.f32 %v636, %v637
  %v641 = vperm.slane %v456, 0
  %v642 = vadd.f32 %v638, %v641
  %v643 = vadd.f32 %v639, %v641
  %v644 = vadd.f32 %v640, %v641
  %v645 = vmax.f32 %v642, 0.0
  %v646 = vmax.f32 %v643, 0.0
  %v647 = vmax.f32 %v644, 0.0
  %v651 = vrot.slane %v645, 1
  %v652 = vrot.slane %v646, 1
  %v653 = vsel %vm112, %v651, %v652
  %v654 = vrot.slane %v647, 1
  %v655 = vsel %vm112, %v652, %v654
  %v660 = vsel %vm112, %v654, %v651
  %v661 = vmax.f32 %v645, %v653
  %v662 = vmax.f32 %v646, %v655
  %v663 = vmax.f32 %v647, %v660
  %v665 = vsel %vm543, %v457, 0
  %v668 = vsel %vm543, %v458, 0
  %670 = vmatpush.msra.mxu0 0.0
  %671 = vmatpush.msra.mxu0 0.0
  %672 = vmatpush.msra.mxu0 0.0
  %673 = vmatpush.msra.mxu0 0.0
  %674 = vmatpush.msra.mxu0 0.0
  %675 = vmatpush.msra.mxu0 0.0
  %676 = vmatpush.msra.mxu0 0.0
  %677 = vmatpush.msra.mxu0 0.0
  %678 = vmatpush.msra.mxu0 0.0
  %679 = vmatpush.msra.mxu0 0.0
  %680 = vmatpush.msra.mxu0 0.0
  %681 = vmatpush.msra.mxu0 0.0
  %682 = vmatpush.msra.mxu0 0.0
  %683 = vmatpush.msra.mxu0 %v663
  %684 = vmatpush.msra.mxu0 %v662
  %685 = vmatpush.msra.mxu0 %v661
  %686 = vmatmul.f32.gmra.mxu0 %v665
  %v687 = vpop.f32.mrf.mxu0
  %v688 = vadd.f32 0.0, %v687
  %689 = vmatmul.f32.gmra.mxu0 %v668
  %v690 = vpop.f32.mrf.mxu0
  %v691 = vadd.f32 0.0, %v690
  %692 = vdwg.mxu0
  %v694 = vrot.slane %v688, 2
  %695 = vrot.lane.b32.xlu0 %v694, 8
  %v696 = vpop.permute.xlu0 %695
  %v698 = vrot.slane %v688, 4
  %699 = vrot.lane.b32.xlu0 %v698, 16
  %v700 = vpop.permute.xlu0 %699
  %v702 = vrot.slane %v688, 6
  %703 = vrot.lane.b32.xlu0 %v702, 24
  %v704 = vpop.permute.xlu0 %703
  %707 = vrot.lane.b32.xlu0 %v691, 32
  %v708 = vpop.permute.xlu0 %707
  %v710 = vrot.slane %v691, 2
  %711 = vrot.lane.b32.xlu0 %v710, 40
  %v712 = vpop.permute.xlu0 %711
  %v714 = vsel %vm303, %v688, %v696
  %v715 = vsel %vm204, %v714, %v700
  %v716 = vsel %vm543, %v715, %v704
  %v717 = vsel %vm211, %v716, %v708
  %vm718 = vcmask 326656
  %v719 = vsel %vm718, %v717, %v712
  %v720 = vld [vmem:[%s2] sm:$0xff]
  %v721 = vld [vmem:[%s2 + $0x8] sm:$0xff]
  %v722 = vld [vmem:[%s2 + $0x10] sm:$0xff]
  %v723 = vld [vmem:[%s2 + $0x18] sm:$0xff]
  %v724 = vld [vmem:[%s2 + $0x20] sm:$0xff]
  %v725 = vld [vmem:[%s2 + $0x28] sm:$0xff]
  %v726 = vld [vmem:[%s3 + $0x6] sm:$0x1]
  %v727 = vperm.slane %v726, 0
  %v729 = vsel %vm219, %v719, 0
  %731 = vmatpush.msra.mxu0 0.0
  %732 = vmatpush.msra.mxu0 0.0
  %733 = vmatpush.msra.mxu0 0.0
  %734 = vmatpush.msra.mxu0 0.0
  %735 = vmatpush.msra.mxu0 0.0
  %736 = vmatpush.msra.mxu0 0.0
  %737 = vmatpush.msra.mxu0 0.0
  %738 = vmatpush.msra.mxu0 0.0
  %739 = vmatpush.msra.mxu0 0.0
  %740 = vmatpush.msra.mxu0 0.0
  %741 = vmatpush.msra.mxu0 %v725
  %742 = vmatpush.msra.mxu0 %v724
  %743 = vmatpush.msra.mxu0 %v723
  %744 = vmatpush.msra.mxu0 %v722
  %745 = vmatpush.msra.mxu0 %v721
  %746 = vmatpush.msra.mxu0 %v720
  %747 = vmatmul.f32.gmra.mxu0 %v729
  %v748 = vpop.f32.mrf.mxu0
  %v749 = vadd.f32 %v727, %v748
  %750 = vdwg.mxu0
  %v751 = vmax.f32 %v749, 0.0
  %v752 = vld [vmem:[%s3 + $0x8] sm:$0x1]
  %v753 = vperm.slane %v752, 0
  %v754 = vmul.f32 %v751, %v753
  %vm755 = vcmask 254976
  %v756 = vsel %vm755, %v754, 0.0
  %757 = vadd.xlane.f32.xlu0 %v756
  %v758 = vpop.xlane.xlu0 %757
  %v759 = vld [vmem:[%s3 + $0x7] sm:$0x1]
  %v760 = vperm.slane %v759, 0
  %v761 = vadd.f32 %v758, %v760
  %v762 = vxor.u32 %v761, 2147483648
  %v763 = vmul.f32 %v762, 1.442695
  %v764 = vpow.pop %v763
  %v765 = vadd.f32 %v764, 1.0
  %v766 = vrcp.pop %v765
  %v767 = vmul.f32 %v765, %v766
  %v768 = vsub.f32 1.0, %v767
  %v769 = vmul.f32 %v766, %v768
  %v770 = vadd.f32 %v766, %v769
  %vm771 = vweird.f32 %v765
  %vm772 = vweird.f32 %v766
  %vm773 = vmor %vm771, %vm772
  %v774 = vsel %vm773, %v766, %v770
  %v775 = vand.u32 2147483647, %v765
  %vm776 = vcmp.eq.f32.partialorder %v775, 8.507059e+37
  %v777 = vand.u32 %v765, 2147483648
  %v778 = vor.u32 1.1754944e-38, %v777
  %v779 = vsel %vm776, %v778, %v774
  %v780 = vmul.f32 1.0, %v779
  %vm781 = vcmask 1024
  %782 = vst.msk [vmem:[%s7] sm:$0x3] %vm781, %v780
  // Predicated region
  $region30: #{tpu_custom_call.1} parent=0 // pred_check
    _
  $region31: #{tpu_custom_call.1} parent=0 // pred_check_branch
    %784 = sbr.rel (0) target = $region33
  $region32: #{tpu_custom_call.1} parent=0 // pred_region
    _
  $region33: #{tpu_custom_call.1} parent=0 // pred_fallthru
    _
  // Predicated region
  $region34: #{tpu_custom_call.1} parent=0 // pred_check
    _
  $region35: #{tpu_custom_call.1} parent=0 // pred_check_branch
    %786 = sbr.rel (0) target = $region37
  $region36: #{tpu_custom_call.1} parent=0 // pred_region
    _
  $region37: #{tpu_custom_call.1} parent=0 // pred_fallthru
    _

</llo_original>
